<compile_context>
chip_gen: v7x
topology: tpu7x:2x2x1
jax: 0.10.0
libtpu: 0.0.40
codegen_flags: <defaults>
</compile_context>

<pallas_src>
import functools

import jax
import jax.numpy as jnp
from jax.experimental import pallas as pl
from jax.experimental.pallas import tpu as pltpu


def _attention2d_kernel(x_ref, w1t_ref, b1_ref, w2t_ref, b2_ref, o_ref,
                        acc_ref, *, inv_hw):
    # x_ref:   (B_tile, C, HW_tile)   streamed spatial tile
    # w1t_ref: (C, k)   b1_ref: (1, k)
    # w2t_ref: (k, k)   b2_ref: (1, k)
    # o_ref:   (B_tile, k)            written on the last spatial step
    # acc_ref: (B_tile, C) f32        running spatial sum (VMEM scratch)
    s = pl.program_id(1)

    @pl.when(s == 0)
    def _init():
        acc_ref[...] = jnp.zeros_like(acc_ref)

    # Hot loop: load tile, cast (bf16-safe), sum over the lane (spatial) axis
    # and accumulate in f32.  Zero-padded spatial columns contribute nothing.
    acc_ref[...] += jnp.sum(x_ref[...].astype(jnp.float32), axis=-1)

    @pl.when(s == pl.num_programs(1) - 1)
    def _finalize():
        pooled = acc_ref[...] * inv_hw                            # mean (B_t, C)

        # fc1 (1x1 conv == linear C -> k) + ReLU.
        h = jnp.dot(pooled, w1t_ref[...],
                    preferred_element_type=jnp.float32) + b1_ref[...]
        h = jnp.maximum(h, 0.0)

        # fc2 (1x1 conv == linear k -> k).
        logits = jnp.dot(h, w2t_ref[...],
                         preferred_element_type=jnp.float32) + b2_ref[...]

        # Softmax over k (F.softmax default dim=1 for a 2-D tensor).
        m = jnp.max(logits, axis=-1, keepdims=True)
        e = jnp.exp(logits - m)
        denom = jnp.sum(e, axis=-1, keepdims=True)
        o_ref[...] = (e * pl.reciprocal(denom, approx=True)).astype(o_ref.dtype)


def _pick_b_tile(B):
    # Output block is (B_tile, k): B_tile must be a multiple of 8 or the full
    # batch.  Keep it small so the batch grid axis exists for megacore.
    return 8 if B % 8 == 0 else B


def _pick_hw_tile(b_tile, C, HW, itemsize):
    # Lane-dense (multiple of 128), as big as possible (>=512 when the data
    # allows) to amortize the ~0.35us per-grid-step cost, capped at 2048 and
    # by an ~8 MiB budget for the two (double-buffered) x blocks so the
    # working set fits default scoped VMEM on every generation.
    budget = 8 << 20
    per_col = max(1, b_tile * C * itemsize)           # bytes per spatial column
    max_tile = max(128, (budget // (2 * per_col)) // 128 * 128)
    hw_pad128 = ((HW + 127) // 128) * 128
    return min(2048, max_tile, hw_pad128)


def attention2d(x_nchw, w1, b1, w2, b2):
    """x_nchw: (B, C, H, W); w1: (k, C); b1: (k,); w2: (k, k); b2: (k,).

    Returns (B, k) softmax attention weights (float32).
    """
    B, C, H, W = x_nchw.shape
    k = w1.shape[0]
    HW = H * W

    # Layout plumbing (cheap, done once in plain JAX):
    #   NCHW -> (B, C, HW) is a free contiguous reshape; weights are
    #   pre-transposed so the kernel matmuls need no in-kernel .T (XLU).
    x = x_nchw.reshape(B, C, HW)
    w1t = jnp.asarray(w1, jnp.float32).T.reshape(C, k)
    w2t = jnp.asarray(w2, jnp.float32).T.reshape(k, k)
    b1_2d = jnp.asarray(b1, jnp.float32).reshape(1, k)
    b2_2d = jnp.asarray(b2, jnp.float32).reshape(1, k)

    b_tile = _pick_b_tile(B)
    itemsize = jnp.dtype(x.dtype).itemsize
    hw_tile = _pick_hw_tile(b_tile, C, HW, itemsize)
    hw_pad = pl.cdiv(HW, hw_tile) * hw_tile
    if hw_pad != HW:
        # Zero-pad the spatial axis; zeros don't affect the accumulated sum
        # and the mean divides by the true HW inside the kernel.
        x = jnp.pad(x, ((0, 0), (0, 0), (0, hw_pad - HW)))

    grid = (B // b_tile, hw_pad // hw_tile)   # reduction (HW) axis last

    kernel = functools.partial(_attention2d_kernel, inv_hw=1.0 / float(HW))

    return pl.pallas_call(
        kernel,
        out_shape=jax.ShapeDtypeStruct((B, k), jnp.float32),
        grid_spec=pltpu.PrefetchScalarGridSpec(
            num_scalar_prefetch=0,
            grid=grid,
            in_specs=[
                # Streamed, double-buffered x tile.
                pl.BlockSpec((b_tile, C, hw_tile), lambda b, s: (b, 0, s)),
                # Weights/biases: constant index_map -> DMA'd once, resident.
                pl.BlockSpec((C, k), lambda b, s: (0, 0)),
                pl.BlockSpec((1, k), lambda b, s: (0, 0)),
                pl.BlockSpec((k, k), lambda b, s: (0, 0)),
                pl.BlockSpec((1, k), lambda b, s: (0, 0)),
            ],
            # Output block independent of the spatial axis -> resident across
            # the reduction; written once on the final step.
            out_specs=pl.BlockSpec((b_tile, k), lambda b, s: (b, 0)),
            scratch_shapes=[pltpu.VMEM((b_tile, C), jnp.float32)],
        ),
        compiler_params=pltpu.CompilerParams(
            # batch blocks independent -> "parallel" (megacore on v7x);
            # spatial reduction -> "arbitrary".
            dimension_semantics=("parallel", "arbitrary")),
    )(x, w1t, b1_2d, w2t, b2_2d)


def _reference(x_nchw, w1, b1, w2, b2):
    pooled = jnp.mean(x_nchw, axis=(2, 3))                 # (B, C)
    h = jnp.maximum(pooled @ w1.T + b1, 0.0)               # (B, k)
    logits = h @ w2.T + b2                                  # (B, k)
    return jax.nn.softmax(logits, axis=-1)


if __name__ == "__main__":
    key = jax.random.PRNGKey(0)
    B, C, H, W = 2, 4, 16, 16
    k = 8

    kx, kw1, kb1, kw2, kb2 = jax.random.split(key, 5)
    x = jax.random.normal(kx, (B, C, H, W), dtype=jnp.float32)
    # Parameter shapes from Conv2d(in_planes, k, 1) / Conv2d(k, k, 1).
    w1 = jax.random.normal(kw1, (k, C), dtype=jnp.float32) * 0.1
    b1 = jax.random.normal(kb1, (k,), dtype=jnp.float32) * 0.1
    w2 = jax.random.normal(kw2, (k, k), dtype=jnp.float32) * 0.1
    b2 = jax.random.normal(kb2, (k,), dtype=jnp.float32) * 0.1

    out = attention2d(x, w1, b1, w2, b2)
    out = jax.block_until_ready(out)

    ref = _reference(x, w1, b1, w2, b2)
    assert out.shape == (B, k)
    # Tolerance accounts for the EUP approximate reciprocal (~1e-4 relative)
    # used for the softmax denominator.
    assert jnp.allclose(out, ref, atol=2e-3, rtol=2e-3), (out, ref)
    assert jnp.allclose(jnp.sum(out, axis=-1), 1.0, atol=2e-3)

    print("KERNEL_OK")
</pallas_src>

<mosaic_0001>
module attributes {stable_mosaic.version = 11 : i64} {
  func.func @_attention2d_kernel(%arg0: i32, %arg1: i32, %arg2: memref<2x4x256xf32, #tpu.memory_space<vmem>>, %arg3: memref<4x8xf32, #tpu.memory_space<vmem>>, %arg4: memref<1x8xf32, #tpu.memory_space<vmem>>, %arg5: memref<8x8xf32, #tpu.memory_space<vmem>>, %arg6: memref<1x8xf32, #tpu.memory_space<vmem>>, %arg7: memref<2x8xf32, #tpu.memory_space<vmem>>, %arg8: memref<2x4xf32, #tpu.memory_space<vmem>>) attributes {dimension_semantics = [#tpu.dimension_semantics<parallel>, #tpu.dimension_semantics<arbitrary>], iteration_bounds = array<i64: 1, 1>, scalar_prefetch = 0 : i64, scratch_operands = 1 : i64, tpu.core_type = #tpu.core_type<tc>, window_params = [{transform_indices = @transform_0, window_bounds = array<i64: 2, 4, 256>}, {pipeline_mode = #tpu.pipeline_mode<synchronous>, transform_indices = @transform_1, window_bounds = array<i64: 4, 8>}, {pipeline_mode = #tpu.pipeline_mode<synchronous>, transform_indices = @transform_2, window_bounds = array<i64: 1, 8>}, {pipeline_mode = #tpu.pipeline_mode<synchronous>, transform_indices = @transform_3, window_bounds = array<i64: 8, 8>}, {pipeline_mode = #tpu.pipeline_mode<synchronous>, transform_indices = @transform_4, window_bounds = array<i64: 1, 8>}, {transform_indices = @transform_5, window_bounds = array<i64: 2, 8>}]} {
    %c0_i32 = arith.constant 0 : i32
    %0 = arith.cmpi eq, %arg1, %c0_i32 : i32
    %1 = arith.extui %0 : i1 to i32
    %c0_i32_0 = arith.constant 0 : i32
    %2 = arith.cmpi ne, %1, %c0_i32_0 : i32
    scf.if %2 {
      %cst_9 = arith.constant 0.000000e+00 : f32
      %11 = vector.broadcast %cst_9 : f32 to vector<2x4xf32>
      %c0_10 = arith.constant 0 : index
      %c0_11 = arith.constant 0 : index
      %12 = vector.load %arg8[%c0_10, %c0_11] : memref<2x4xf32, #tpu.memory_space<vmem>>, vector<2x4xf32>
      tpu.vector_store %arg8[%c0_10, %c0_11], %11 {strides = array<i32>} : memref<2x4xf32, #tpu.memory_space<vmem>>, vector<2x4xf32>,
    } else {
    }
    %c0 = arith.constant 0 : index
    %c0_1 = arith.constant 0 : index
    %3 = vector.load %arg8[%c0, %c0_1] : memref<2x4xf32, #tpu.memory_space<vmem>>, vector<2x4xf32>
    %c0_2 = arith.constant 0 : index
    %c0_3 = arith.constant 0 : index
    %c0_4 = arith.constant 0 : index
    %4 = vector.load %arg2[%c0_2, %c0_3, %c0_4] : memref<2x4x256xf32, #tpu.memory_space<vmem>>, vector<2x4x256xf32>
    %cst = arith.constant dense<0.000000e+00> : vector<2x4xf32>
    %5 = vector.multi_reduction <add>, %4, %cst [2] : vector<2x4x256xf32> to vector<2x4xf32>
    %6 = arith.addf %3, %5 : vector<2x4xf32>
    %c0_5 = arith.constant 0 : index
    %c0_6 = arith.constant 0 : index
    %7 = vector.load %arg8[%c0_5, %c0_6] : memref<2x4xf32, #tpu.memory_space<vmem>>, vector<2x4xf32>
    tpu.vector_store %arg8[%c0_5, %c0_6], %6 {strides = array<i32>} : memref<2x4xf32, #tpu.memory_space<vmem>>, vector<2x4xf32>,
    %c0_i32_7 = arith.constant 0 : i32
    %8 = arith.cmpi eq, %arg1, %c0_i32_7 : i32
    %9 = arith.extui %8 : i1 to i32
    %c0_i32_8 = arith.constant 0 : i32
    %10 = arith.cmpi ne, %9, %c0_i32_8 : i32
    scf.if %10 {
      %c0_9 = arith.constant 0 : index
      %c0_10 = arith.constant 0 : index
      %11 = vector.load %arg8[%c0_9, %c0_10] : memref<2x4xf32, #tpu.memory_space<vmem>>, vector<2x4xf32>
      %cst_11 = arith.constant 3.906250e-03 : f32
      %12 = vector.broadcast %cst_11 : f32 to vector<2x4xf32>
      %13 = arith.mulf %11, %12 : vector<2x4xf32>
      %c0_12 = arith.constant 0 : index
      %c0_13 = arith.constant 0 : index
      %14 = vector.load %arg3[%c0_12, %c0_13] : memref<4x8xf32, #tpu.memory_space<vmem>>, vector<4x8xf32>
      %cst_14 = arith.constant dense<0.000000e+00> : vector<2x8xf32>
      %15 = tpu.matmul %13, %14, %cst_14 {dimension_numbers = #tpu.dot_dimension_numbers<[1], [0], [0], [1], [0, 0, 1, 1], [], []>} : vector<2x4xf32>, vector<4x8xf32>, vector<2x8xf32> -> vector<2x8xf32>
      %c0_15 = arith.constant 0 : index
      %c0_16 = arith.constant 0 : index
      %16 = vector.load %arg4[%c0_15, %c0_16] : memref<1x8xf32, #tpu.memory_space<vmem>>, vector<1x8xf32>
      %17 = vector.broadcast %16 : vector<1x8xf32> to vector<2x8xf32>
      %18 = arith.addf %15, %17 : vector<2x8xf32>
      %cst_17 = arith.constant 0.000000e+00 : f32
      %19 = vector.broadcast %cst_17 : f32 to vector<2x8xf32>
      %20 = arith.maximumf %18, %19 : vector<2x8xf32>
      %c0_18 = arith.constant 0 : index
      %c0_19 = arith.constant 0 : index
      %21 = vector.load %arg5[%c0_18, %c0_19] : memref<8x8xf32, #tpu.memory_space<vmem>>, vector<8x8xf32>
      %cst_20 = arith.constant dense<0.000000e+00> : vector<2x8xf32>
      %22 = tpu.matmul %20, %21, %cst_20 {dimension_numbers = #tpu.dot_dimension_numbers<[1], [0], [0], [1], [0, 0, 1, 1], [], []>} : vector<2x8xf32>, vector<8x8xf32>, vector<2x8xf32> -> vector<2x8xf32>
      %c0_21 = arith.constant 0 : index
      %c0_22 = arith.constant 0 : index
      %23 = vector.load %arg6[%c0_21, %c0_22] : memref<1x8xf32, #tpu.memory_space<vmem>>, vector<1x8xf32>
      %24 = vector.broadcast %23 : vector<1x8xf32> to vector<2x8xf32>
      %25 = arith.addf %22, %24 : vector<2x8xf32>
      %cst_23 = arith.constant dense<0xFF800000> : vector<2xf32>
      %26 = vector.multi_reduction <maximumf>, %25, %cst_23 [1] : vector<2x8xf32> to vector<2xf32>
      %27 = vector.shape_cast %26 : vector<2xf32> to vector<2x1xf32>
      %28 = vector.broadcast %27 : vector<2x1xf32> to vector<2x8xf32>
      %29 = arith.subf %25, %28 : vector<2x8xf32>
      %30 = math.exp %29 : vector<2x8xf32>
      %cst_24 = arith.constant dense<0.000000e+00> : vector<2xf32>
      %31 = vector.multi_reduction <add>, %30, %cst_24 [1] : vector<2x8xf32> to vector<2xf32>
      %32 = vector.shape_cast %31 : vector<2xf32> to vector<2x1xf32>
      %33 = tpu.reciprocal %32 {approx = true} : vector<2x1xf32> -> vector<2x1xf32>
      %34 = vector.broadcast %33 : vector<2x1xf32> to vector<2x8xf32>
      %35 = arith.mulf %30, %34 : vector<2x8xf32>
      %c0_25 = arith.constant 0 : index
      %c0_26 = arith.constant 0 : index
      %36 = vector.load %arg7[%c0_25, %c0_26] : memref<2x8xf32, #tpu.memory_space<vmem>>, vector<2x8xf32>
      tpu.vector_store %arg7[%c0_25, %c0_26], %35 {strides = array<i32>} : memref<2x8xf32, #tpu.memory_space<vmem>>, vector<2x8xf32>,
    } else {
    }
    return
  }
  func.func @transform_0(%arg0: i32, %arg1: i32) -> (i32, i32, i32) {
    %c0_i32 = arith.constant 0 : i32
    %c0_i32_0 = arith.constant 0 : i32
    return %arg0, %c0_i32, %arg1 : i32, i32, i32
  }
  func.func @transform_1(%arg0: i32, %arg1: i32) -> (i32, i32) {
    %c0_i32 = arith.constant 0 : i32
    %c0_i32_0 = arith.constant 0 : i32
    %c0_i32_1 = arith.constant 0 : i32
    return %c0_i32, %c0_i32_0 : i32, i32
  }
  func.func @transform_2(%arg0: i32, %arg1: i32) -> (i32, i32) {
    %c0_i32 = arith.constant 0 : i32
    %c0_i32_0 = arith.constant 0 : i32
    %c0_i32_1 = arith.constant 0 : i32
    return %c0_i32, %c0_i32_0 : i32, i32
  }
  func.func @transform_3(%arg0: i32, %arg1: i32) -> (i32, i32) {
    %c0_i32 = arith.constant 0 : i32
    %c0_i32_0 = arith.constant 0 : i32
    %c0_i32_1 = arith.constant 0 : i32
    return %c0_i32, %c0_i32_0 : i32, i32
  }
  func.func @transform_4(%arg0: i32, %arg1: i32) -> (i32, i32) {
    %c0_i32 = arith.constant 0 : i32
    %c0_i32_0 = arith.constant 0 : i32
    %c0_i32_1 = arith.constant 0 : i32
    return %c0_i32, %c0_i32_0 : i32, i32
  }
  func.func @transform_5(%arg0: i32, %arg1: i32) -> (i32, i32) {
    %c0_i32 = arith.constant 0 : i32
    %c0_i32_0 = arith.constant 0 : i32
    return %arg0, %c0_i32 : i32, i32
  }
}

</mosaic_0001>

<llo_original>
// kernel: tpu_custom_call.1
$region0: #{tpu_custom_call.1}
  #allocation0 [shape = 'u32[]', space=smem, size = 0x4, offset = 0x4, fixed_abs, tag = 'smem constant byte address 0x4 - core index']
  #allocation1 [shape = 'u32[144,128]{1,0:T(1,128)}', space=vmem, size = 0x12000, scoped, tag = 'internal scratch']
  #allocation2 [shape = 'f32[2,4]{1,0:T(2,128)}', space=vmem, size = 0x400, scoped, tag = 'scratch operand']
  %s0 = inlined_call_operand.hbm [shape: f32[2,4,256], index: 0, kind: input, shape index: {}]
  %s1 = inlined_call_operand.hbm [shape: f32[4,8], index: 1, kind: input, shape index: {}]
  %s2 = inlined_call_operand.vmem [shape: f32[1,8], index: 2, kind: input, shape index: {}]
  %s3 = inlined_call_operand.vmem [shape: f32[8,8], index: 3, kind: input, shape index: {}]
  %s4 = inlined_call_operand.vmem [shape: f32[1,8], index: 4, kind: input, shape index: {}]
  %s5 = inlined_call_operand.hbm [shape: f32[2,8], index: 5, kind: output, shape index: {}]
  %s6 = sld [smem:[#allocation0]]
  $region46: #{tpu_custom_call.1} parent=0
    _
  %s8 = ssub.s32 1, %s6
  %s9 = scalar_select 0, %s8, %s6
  $region1: #{tpu_custom_call.1} parent=0
    #allocation3 [shape = 'u8[8192]{0}', space=vmem, size = 0x2000, scoped, tag = 'input window, operand 0, single buffered']
    #allocation4 [shape = 's32[1]{0}', space=sflag, size = 0x4, scoped, tag = 'scoped memory for tpu_custom_call.1']
    #allocation5 [shape = 's32[1]{0}', space=sflag, size = 0x4, scoped, tag = 'scoped memory for tpu_custom_call.1']
    #allocation6 [shape = 'u8[2048]{0}', space=vmem, size = 0x800, scoped, tag = 'input window, operand 1, single buffered']
    #allocation7 [shape = 's32[1]{0}', space=sflag, size = 0x4, scoped, tag = 'scoped memory for tpu_custom_call.1']
    #allocation8 [shape = 'u8[1024]{0}', space=vmem, size = 0x400, scoped, tag = 'output window, operand 0, single buffered']
    %10 = vsyncpa [#allocation4], 0
    %11 = vsyncpa [#allocation7], 0
    %12 = vsyncpa [#allocation5], 0
    // Predicated region
    $region2: #{tpu_custom_call.1} parent=1 // pred_check
      _
    $region3: #{tpu_custom_call.1} parent=1 // pred_check_branch
      %14 = sbr.rel (0) target = $region5
    $region4: #{tpu_custom_call.1} parent=1 // pred_region
      %s16 = ssub.s32 256, 256
      %17 = vsyncadd [#allocation4], %s16
      %s18 = sshll.u32 [#allocation3], 4
      %s19 = int_to_ptr.vmem [resolvable:$true] %s18
      %24 = dma.hbm_to_vmem [thread:$0]  %s0, 256, %s19, [#allocation4], 128, 128, 8
    $region5: #{tpu_custom_call.1} parent=1 // pred_fallthru
      _
    // Predicated region
    $region6: #{tpu_custom_call.1} parent=1 // pred_check
      _
    $region7: #{tpu_custom_call.1} parent=1 // pred_check_branch
      %26 = sbr.rel (0) target = $region9
    $region8: #{tpu_custom_call.1} parent=1 // pred_region
      %s28 = ssub.s32 64, 64
      %29 = vsyncadd [#allocation7], %s28
      %s31 = sshll.u32 [#allocation6], 4
      %s32 = int_to_ptr.vmem [resolvable:$true] %s31
      %34 = dma.hbm_to_vmem [thread:$0]  %s1, 64, %s32, [#allocation7]
    $region9: #{tpu_custom_call.1} parent=1 // pred_fallthru
      _
    // Predicated region
    $region10: #{tpu_custom_call.1} parent=1 // pred_check
      _
    $region11: #{tpu_custom_call.1} parent=1 // pred_check_branch
      %36 = sbr.rel (0) target = $region13
    $region12: #{tpu_custom_call.1} parent=1 // pred_region
      _
    $region13: #{tpu_custom_call.1} parent=1 // pred_fallthru
      _
    // Predicated region
    $region14: #{tpu_custom_call.1} parent=1 // pred_check
      _
    $region15: #{tpu_custom_call.1} parent=1 // pred_check_branch
      %38 = sbr.rel (0) target = $region17
    $region16: #{tpu_custom_call.1} parent=1 // pred_region
      _
    $region17: #{tpu_custom_call.1} parent=1 // pred_fallthru
      _
    // Predicated region
    $region18: #{tpu_custom_call.1} parent=1 // pred_check
      _
    $region19: #{tpu_custom_call.1} parent=1 // pred_check_branch
      %40 = sbr.rel (0) target = $region21
    $region20: #{tpu_custom_call.1} parent=1 // pred_region
      _
    $region21: #{tpu_custom_call.1} parent=1 // pred_fallthru
      _
    // Predicated region
    $region22: #{tpu_custom_call.1} parent=1 // pred_check
      _
    $region23: #{tpu_custom_call.1} parent=1 // pred_check_branch
      %42 = sbr.rel (0) target = $region25
    $region24: #{tpu_custom_call.1} parent=1 // pred_region
      %43 = dma.done [#allocation4], 256
    $region25: #{tpu_custom_call.1} parent=1 // pred_fallthru
      _
    // Predicated region
    $region26: #{tpu_custom_call.1} parent=1 // pred_check
      _
    $region27: #{tpu_custom_call.1} parent=1 // pred_check_branch
      %45 = sbr.rel (0) target = $region29
    $region28: #{tpu_custom_call.1} parent=1 // pred_region
      %46 = dma.done [#allocation7], 64
    $region29: #{tpu_custom_call.1} parent=1 // pred_fallthru
      _
    %p47 = scmp.eq.s32.totalorder 0, 0
    // Predicated region
    $region30: #{tpu_custom_call.1} parent=1 // pred_check
      %p48 = pneg %p47
    $region31: #{tpu_custom_call.1} parent=1 // pred_check_branch
      %50 = sbr.rel (%p48) target = $region33
    $region32: #{tpu_custom_call.1} parent=1 // pred_region
      %vm51 = vcmask 25600
      %52 = vst.msk [vmem:[#allocation2] sm:$0x3] %vm51, 0.0
    $region33: #{tpu_custom_call.1} parent=1 // pred_fallthru
      _
    %v53 = vld [vmem:[#allocation2] sm:$0x3]
    %v54 = vld [vmem:[#allocation3] sm:$0xff]
    %v55 = vld [vmem:[#allocation3 + $0x8] sm:$0xff]
    %v58 = vcombine.high %v54, %v54
    %v59 = vcombine.high %v55, %v55
    %vm62 = vcmask 1043456
    %v63 = vsel %vm62, %v54, 0.0
    %v64 = vsel %vm62, %v58, 0.0
    %v65 = vadd.f32 %v63, %v64
    %66 = vadd.xlane.f32.xlu0 %v65
    %v67 = vpop.xlane.xlu0 %66
    %v68 = vsel %vm62, %v55, 0.0
    %v69 = vsel %vm62, %v59, 0.0
    %v70 = vadd.f32 %v68, %v69
    %71 = vadd.xlane.f32.xlu0 %v70
    %v72 = vpop.xlane.xlu0 %71
    %v75 = vlaneseq
    %v76 = vand.u32 %v75, 127
    %v77 = vlaneseq
    %v78 = vshrl.u32 %v77, 7
    %v79 = vsub.s32 %v76, %v78
    %v80 = vrot.slane %v67, %v79
    %v81 = vlaneseq
    %v82 = vshrl.u32 %v81, 7
    %v83 = vsub.s32 %v76, %v82
    %v84 = vrot.slane %v72, %v83
    %vm85 = vcmask 1041409
    %v86 = vsel %vm85, %v84, %v80
    %v88 = vadd.f32 %v53, %v86
    %vm89 = vcmask 25600
    %90 = vst.msk [vmem:[#allocation2] sm:$0x3] %vm89, %v88
    // Predicated region
    $region34: #{tpu_custom_call.1} parent=1 // pred_check
      %p91 = pneg %p47
    $region35: #{tpu_custom_call.1} parent=1 // pred_check_branch
      %93 = sbr.rel (%p91) target = $region37
    $region36: #{tpu_custom_call.1} parent=1 // pred_region
      %v94 = vld [vmem:[#allocation2] sm:$0x3]
      %v95 = vmul.f32 %v94, 0.00390625
      %v96 = vld [vmem:[#allocation6] sm:$0xf]
      %v97 = vld [vmem:[%s2] sm:$0x1]
      %v99 = vlaneseq
      %v100 = vshrl.u32 %v99, 7
      %v101 = vsub.s32 0, %v100
      %v102 = vrot.slane %v97, %v101
      %vm104 = vcmask 31744
      %v106 = vsel %vm104, %v95, 0
      %v109 = vsel %vm62, %v96, 0
      %111 = vmatprep.subr.mxu0 0.0
      %112 = vmatpush1.msra.mxu0 %v109
      %113 = vmatprep.subr.mxu0 0.0
      %114 = vmatpush1.msra.mxu0 0.0
      %115 = vmatprep.subr.mxu0 0.0
      %116 = vmatpush1.msra.mxu0 0.0
      %117 = vmatprep.subr.mxu0 0.0
      %118 = vmatpush1.msra.mxu0 0.0
      %119 = vmatprep.subr.mxu0 0.0
      %120 = vmatpush1.msra.mxu0 0.0
      %121 = vmatprep.subr.mxu0 0.0
      %122 = vmatpush1.msra.mxu0 0.0
      %123 = vmatprep.subr.mxu0 0.0
      %124 = vmatpush1.msra.mxu0 0.0
      %125 = vmatprep.subr.mxu0 0.0
      %126 = vmatpush1.msra.mxu0 0.0
      %127 = vmatprep.subr.mxu0 0.0
      %128 = vmatpush1.msra.mxu0 0.0
      %129 = vmatprep.subr.mxu0 0.0
      %130 = vmatpush1.msra.mxu0 0.0
      %131 = vmatprep.subr.mxu0 0.0
      %132 = vmatpush1.msra.mxu0 0.0
      %133 = vmatprep.subr.mxu0 0.0
      %134 = vmatpush1.msra.mxu0 0.0
      %135 = vmatprep.subr.mxu0 0.0
      %136 = vmatpush1.msra.mxu0 0.0
      %137 = vmatprep.subr.mxu0 0.0
      %138 = vmatpush1.msra.mxu0 0.0
      %139 = vmatprep.subr.mxu0 0.0
      %140 = vmatpush1.msra.mxu0 0.0
      %141 = vmatprep.subr.mxu0 0.0
      %142 = vmatpush1.msra.mxu0 0.0
      %143 = vmatprep.subr.mxu0 0.0
      %144 = vmatpush1.msra.mxu0 0.0
      %145 = vmatprep.subr.mxu0 0.0
      %146 = vmatpush1.msra.mxu0 0.0
      %147 = vmatprep.subr.mxu0 0.0
      %148 = vmatpush1.msra.mxu0 0.0
      %149 = vmatprep.subr.mxu0 0.0
      %150 = vmatpush1.msra.mxu0 0.0
      %151 = vmatprep.subr.mxu0 0.0
      %152 = vmatpush1.msra.mxu0 0.0
      %153 = vmatprep.subr.mxu0 0.0
      %154 = vmatpush1.msra.mxu0 0.0
      %155 = vmatprep.subr.mxu0 0.0
      %156 = vmatpush1.msra.mxu0 0.0
      %157 = vmatprep.subr.mxu0 0.0
      %158 = vmatpush1.msra.mxu0 0.0
      %159 = vmatprep.subr.mxu0 0.0
      %160 = vmatpush1.msra.mxu0 0.0
      %161 = vmatprep.subr.mxu0 0.0
      %162 = vmatpush1.msra.mxu0 0.0
      %163 = vmatprep.subr.mxu0 0.0
      %164 = vmatpush1.msra.mxu0 0.0
      %165 = vmatprep.subr.mxu0 0.0
      %166 = vmatpush1.msra.mxu0 0.0
      %167 = vmatprep.subr.mxu0 0.0
      %168 = vmatpush1.msra.mxu0 0.0
      %169 = vmatprep.subr.mxu0 0.0
      %170 = vmatpush1.msra.mxu0 0.0
      %171 = vmatprep.subr.mxu0 0.0
      %172 = vmatpush1.msra.mxu0 0.0
      %173 = vmatprep.subr.mxu0 0.0
      %174 = vmatpush1.msra.mxu0 0.0
      %175 = vmatprep.mubr.f32.mxu0 0.0
      %176 = vmatmul.mubr.f32.gmra.mrb[0].mxu0 %v106
      %v177 = vpop.f32.mrb[0].mxu0
      %v178 = vadd.f32 %v102, %v177
      %v179 = vpop.f32.mrb[0].mxu0
      %180 = vdwg.mxu0
      %v181 = vmax.f32 %v178, 0.0
      %v182 = vld [vmem:[%s3] sm:$0xff]
      %v183 = vld [vmem:[%s4] sm:$0x1]
      %v185 = vlaneseq
      %v186 = vshrl.u32 %v185, 7
      %v187 = vsub.s32 0, %v186
      %v188 = vrot.slane %v183, %v187
      %vm190 = vcmask 64512
      %v192 = vsel %vm190, %v181, 0
      %194 = vmatprep.subr.mxu0 0.0
      %195 = vmatpush1.msra.mxu0 %v182
      %196 = vmatprep.subr.mxu0 0.0
      %197 = vmatpush1.msra.mxu0 0.0
      %198 = vmatprep.subr.mxu0 0.0
      %199 = vmatpush1.msra.mxu0 0.0
      %200 = vmatprep.subr.mxu0 0.0
      %201 = vmatpush1.msra.mxu0 0.0
      %202 = vmatprep.subr.mxu0 0.0
      %203 = vmatpush1.msra.mxu0 0.0
      %204 = vmatprep.subr.mxu0 0.0
      %205 = vmatpush1.msra.mxu0 0.0
      %206 = vmatprep.subr.mxu0 0.0
      %207 = vmatpush1.msra.mxu0 0.0
      %208 = vmatprep.subr.mxu0 0.0
      %209 = vmatpush1.msra.mxu0 0.0
      %210 = vmatprep.subr.mxu0 0.0
      %211 = vmatpush1.msra.mxu0 0.0
      %212 = vmatprep.subr.mxu0 0.0
      %213 = vmatpush1.msra.mxu0 0.0
      %214 = vmatprep.subr.mxu0 0.0
      %215 = vmatpush1.msra.mxu0 0.0
      %216 = vmatprep.subr.mxu0 0.0
      %217 = vmatpush1.msra.mxu0 0.0
      %218 = vmatprep.subr.mxu0 0.0
      %219 = vmatpush1.msra.mxu0 0.0
      %220 = vmatprep.subr.mxu0 0.0
      %221 = vmatpush1.msra.mxu0 0.0
      %222 = vmatprep.subr.mxu0 0.0
      %223 = vmatpush1.msra.mxu0 0.0
      %224 = vmatprep.subr.mxu0 0.0
      %225 = vmatpush1.msra.mxu0 0.0
      %226 = vmatprep.subr.mxu0 0.0
      %227 = vmatpush1.msra.mxu0 0.0
      %228 = vmatprep.subr.mxu0 0.0
      %229 = vmatpush1.msra.mxu0 0.0
      %230 = vmatprep.subr.mxu0 0.0
      %231 = vmatpush1.msra.mxu0 0.0
      %232 = vmatprep.subr.mxu0 0.0
      %233 = vmatpush1.msra.mxu0 0.0
      %234 = vmatprep.subr.mxu0 0.0
      %235 = vmatpush1.msra.mxu0 0.0
      %236 = vmatprep.subr.mxu0 0.0
      %237 = vmatpush1.msra.mxu0 0.0
      %238 = vmatprep.subr.mxu0 0.0
      %239 = vmatpush1.msra.mxu0 0.0
      %240 = vmatprep.subr.mxu0 0.0
      %241 = vmatpush1.msra.mxu0 0.0
      %242 = vmatprep.subr.mxu0 0.0
      %243 = vmatpush1.msra.mxu0 0.0
      %244 = vmatprep.subr.mxu0 0.0
      %245 = vmatpush1.msra.mxu0 0.0
      %246 = vmatprep.subr.mxu0 0.0
      %247 = vmatpush1.msra.mxu0 0.0
      %248 = vmatprep.subr.mxu0 0.0
      %249 = vmatpush1.msra.mxu0 0.0
      %250 = vmatprep.subr.mxu0 0.0
      %251 = vmatpush1.msra.mxu0 0.0
      %252 = vmatprep.subr.mxu0 0.0
      %253 = vmatpush1.msra.mxu0 0.0
      %254 = vmatprep.subr.mxu0 0.0
      %255 = vmatpush1.msra.mxu0 0.0
      %256 = vmatprep.subr.mxu0 0.0
      %257 = vmatpush1.msra.mxu0 0.0
      %258 = vmatprep.mubr.f32.mxu0 0.0
      %259 = vmatmul.mubr.f32.gmra.mrb[0].mxu0 %v192
      %v260 = vpop.f32.mrb[0].mxu0
      %v261 = vadd.f32 %v188, %v260
      %v262 = vpop.f32.mrb[0].mxu0
      %263 = vdwg.mxu0
      %vm264 = vcmask 58368
      %v265 = vsel %vm264, %v261, -inf
      %266 = vmax.xlane.f32.xlu0 %v265
      %v267 = vpop.xlane.xlu0 %266
      %v268 = vsub.f32 %v261, %v267
      %v269 = vmul.f32 %v268, 1.442695
      %v270 = vpow.pop %v269
      %v271 = vsel %vm264, %v270, 0.0
      %272 = vadd.xlane.f32.xlu0 %v271
      %v273 = vpop.xlane.xlu0 %272
      %v274 = vrcp.pop %v273
      %v275 = vmul.f32 %v270, %v274
      %276 = vst.msk [vmem:[#allocation8] sm:$0x3] %vm264, %v275
    $region37: #{tpu_custom_call.1} parent=1 // pred_fallthru
      _
    // Predicated region
    $region38: #{tpu_custom_call.1} parent=1 // pred_check
      _
    $region39: #{tpu_custom_call.1} parent=1 // pred_check_branch
      %278 = sbr.rel (0) target = $region41
    $region40: #{tpu_custom_call.1} parent=1 // pred_region
      %s280 = ssub.s32 32, 32
      %281 = vsyncadd [#allocation5], %s280
      %s283 = sshll.u32 [#allocation8], 4
      %s284 = int_to_ptr.vmem [resolvable:$true] %s283
      %286 = dma.vmem_to_hbm [thread:$0]  %s284, 32, %s5, [#allocation5]
    $region41: #{tpu_custom_call.1} parent=1 // pred_fallthru
      _
    // Predicated region
    $region42: #{tpu_custom_call.1} parent=1 // pred_check
      _
    $region43: #{tpu_custom_call.1} parent=1 // pred_check_branch
      %288 = sbr.rel (0) target = $region45
    $region44: #{tpu_custom_call.1} parent=1 // pred_region
      %289 = dma.done [#allocation5], 32
    $region45: #{tpu_custom_call.1} parent=1 // pred_fallthru
      _
    %290 = vsyncpa [#allocation4], 1
    %291 = vsyncpa [#allocation7], 1
    %292 = vsyncpa [#allocation5], 1

</llo_original>
